<compile_context>
chip_gen: v7x
topology: tpu7x:2x2x1
jax: 0.10.0
libtpu: 0.0.40
codegen_flags: <defaults>
</compile_context>

<pallas_src>
import functools

import jax
import jax.numpy as jnp
from jax.experimental import pallas as pl
from jax.experimental.pallas import tpu as pltpu


def _poe_kernel(alpha_ref, mu_ref, var_ref, eps_ref, out_ref, *,
                num_modalities, eps_val):
    # alpha_ref: SMEM (M,)        -- softmax(phi)
    # mu_ref   : VMEM (M, TB, D)
    # var_ref  : VMEM (M, TB, D)
    # eps_ref  : VMEM (TB, S*D)   -- standard-normal noise, (S, D) merged into lanes
    # out_ref  : VMEM (TB, S*D)
    tb, d = mu_ref.shape[1], mu_ref.shape[2]
    sd = out_ref.shape[1]

    t_sum = jnp.zeros((tb, d), jnp.float32)
    mu_t_sum = jnp.zeros((tb, d), jnp.float32)

    # M is tiny & static -> fully unrolled; stream one modality slice at a time
    # from the ref instead of materializing the whole (M, TB, D) stack.
    for m in range(num_modalities):
        a = alpha_ref[m]                                             # scalar (SMEM)
        w = a * pl.reciprocal(var_ref[m] + eps_val, approx=False)    # alpha * T (EUP)
        t_sum = t_sum + w
        mu_t_sum = mu_t_sum + mu_ref[m] * w

    inv_t = pl.reciprocal(t_sum, approx=False)   # variance of the product expert
    mu = mu_t_sum * inv_t                        # (TB, D)
    # NOTE: like the PyTorch module, the sample is scaled by the *variance*
    # (1/t_sum), not its sqrt -- kept to match the reference semantics.

    # Lane-replicate (TB, D) -> (TB, S*D) on the idle MXU so the big FMA and the
    # store below stay lane-dense.  The exact 0/1 selection matrix
    # rep[k, j] = 1 iff (j % D) == k is built in-register (no HBM traffic).
    col = jax.lax.broadcasted_iota(jnp.int32, (d, sd), 1)
    row = jax.lax.broadcasted_iota(jnp.int32, (d, sd), 0)
    rep = (col % d == row).astype(jnp.float32)   # (D, S*D)

    mu_rep = jnp.dot(mu, rep, preferred_element_type=jnp.float32,
                     precision=jax.lax.Precision.HIGHEST)
    var_rep = jnp.dot(inv_t, rep, preferred_element_type=jnp.float32,
                      precision=jax.lax.Precision.HIGHEST)

    out_ref[...] = mu_rep + var_rep * eps_ref[...]


def _choose_batch_tile(b, s, d, m, budget_bytes=12 * 1024 * 1024):
    """Pick a batch tile so double-buffered blocks fit comfortably in VMEM
    (sized for v7x's 64 MiB; plenty of headroom on v5e/v6e's 128 MiB)."""
    per_row = 2 * 4 * (2 * s * d + 2 * m * d)             # eps+out+mu+var, x2 buffers
    tb = max(1, budget_bytes // per_row)
    if tb >= b:
        return b                                          # one block covers the batch
    return max(8, (tb // 8) * 8)                          # keep sublane dim % 8 == 0


def poe_forward(mu_list, var_list, phi, *, sample_num=8, seed=1, eps=1e-8):
    """JAX/Pallas equivalent of PoE.forward (eval mode: seeded noise)."""
    mu_stack = jnp.stack(mu_list, axis=0).astype(jnp.float32)    # (M, B, D)
    var_stack = jnp.stack(var_list, axis=0).astype(jnp.float32)  # (M, B, D)
    m, b, d = mu_stack.shape
    s = sample_num

    alpha = jax.nn.softmax(phi.astype(jnp.float32), axis=0)      # (M,) -> SMEM

    # Deterministic standard-normal noise (mirrors gaussian_noise(..., seed)).
    # TODO(synk): torch.manual_seed's normal stream cannot be reproduced
    # bit-exactly in JAX; jax.random.normal with a fixed key is the equivalent.
    noise = jax.random.normal(jax.random.PRNGKey(seed), (b, s, d), jnp.float32)
    noise2d = noise.reshape(b, s * d)            # free trailing-dim merge

    tb = _choose_batch_tile(b, s, d, m)
    grid = (pl.cdiv(b, tb),)

    kernel = functools.partial(_poe_kernel, num_modalities=m, eps_val=eps)

    out2d = pl.pallas_call(
        kernel,
        out_shape=jax.ShapeDtypeStruct((b, s * d), jnp.float32),
        grid=grid,
        in_specs=[
            pl.BlockSpec(memory_space=pltpu.MemorySpace.SMEM),        # alpha (scalars)
            pl.BlockSpec((m, tb, d), lambda i: (0, i, 0)),            # mu stack
            pl.BlockSpec((m, tb, d), lambda i: (0, i, 0)),            # var stack
            pl.BlockSpec((tb, s * d), lambda i: (i, 0)),              # noise
        ],
        out_specs=pl.BlockSpec((tb, s * d), lambda i: (i, 0)),
        compiler_params=pltpu.CompilerParams(
            dimension_semantics=("parallel",),        # 2x on v7x's 2 TCs; no-op v5e/v6e
            vmem_limit_bytes=48 * 1024 * 1024,        # explicit, fits v7x's 64 MiB VMEM
        ),
    )(alpha, mu_stack, var_stack, noise2d)

    return out2d.reshape(b, s, d)


def poe_reference(mu_list, var_list, phi, noise, eps=1e-8):
    """Pure-JAX reference matching the PyTorch forward (given the same noise)."""
    alpha = jax.nn.softmax(phi, axis=0)
    t_sum = 0.0
    mu_t_sum = 0.0
    for idx, (mu, var) in enumerate(zip(mu_list, var_list)):
        T = 1.0 / (var + eps)
        t_sum = t_sum + alpha[idx] * T
        mu_t_sum = mu_t_sum + mu * alpha[idx] * T
    mu = mu_t_sum / t_sum
    var = 1.0 / t_sum
    return mu[:, None, :] + var[:, None, :] * noise


if __name__ == "__main__":
    modality_num = 2
    batch = 2
    dim = 32
    sample_num = 8        # S*D = 256 -> lane-dense (128-multiple) output blocks
    seed = 1

    # Deterministic parameter init (PoE.__init__: phi = ones(modality_num)).
    phi = jnp.ones((modality_num,), jnp.float32)

    key = jax.random.PRNGKey(0)
    keys = jax.random.split(key, 2 * modality_num)
    mu_list = [jax.random.normal(keys[i], (batch, dim), jnp.float32)
               for i in range(modality_num)]
    # variances must be positive
    var_list = [jax.nn.softplus(jax.random.normal(keys[modality_num + i],
                                                  (batch, dim), jnp.float32)) + 0.1
                for i in range(modality_num)]

    out = poe_forward(mu_list, var_list, phi, sample_num=sample_num, seed=seed)
    out = jax.block_until_ready(out)

    # Check against the pure-JAX reference using the same noise tensor.
    noise = jax.random.normal(jax.random.PRNGKey(seed), (batch, sample_num, dim),
                              jnp.float32)
    ref = poe_reference(mu_list, var_list, phi, noise)

    assert out.shape == (batch, sample_num, dim)
    # Slightly relaxed vs 1e-5: EUP reciprocal + MXU replication vs divide-based
    # reference can differ by a few ulp (still f32-accurate).
    assert jnp.allclose(out, ref, atol=1e-4, rtol=1e-4), \
        float(jnp.max(jnp.abs(out - ref)))

    print("KERNEL_OK")
</pallas_src>

<mosaic_0001>
module attributes {stable_mosaic.version = 11 : i64} {
  func.func @_poe_kernel(%arg0: i32, %arg1: memref<2xf32, #tpu.memory_space<smem>>, %arg2: memref<2x2x32xf32, #tpu.memory_space<vmem>>, %arg3: memref<2x2x32xf32, #tpu.memory_space<vmem>>, %arg4: memref<2x256xf32, #tpu.memory_space<vmem>>, %arg5: memref<2x256xf32, #tpu.memory_space<vmem>>) attributes {dimension_semantics = [#tpu.dimension_semantics<parallel>], iteration_bounds = array<i64: 1>, scalar_prefetch = 0 : i64, scratch_operands = 0 : i64, tpu.core_type = #tpu.core_type<tc>, window_params = [{transform_indices = @transform_0, window_bounds = array<i64: 2>}, {transform_indices = @transform_1, window_bounds = array<i64: 2, 2, 32>}, {transform_indices = @transform_2, window_bounds = array<i64: 2, 2, 32>}, {transform_indices = @transform_3, window_bounds = array<i64: 2, 256>}, {transform_indices = @transform_4, window_bounds = array<i64: 2, 256>}]} {
    %cst = arith.constant 0.000000e+00 : f32
    %0 = vector.broadcast %cst : f32 to vector<2x32xf32>
    %cst_0 = arith.constant 0.000000e+00 : f32
    %1 = vector.broadcast %cst_0 : f32 to vector<2x32xf32>
    %c0 = arith.constant 0 : index
    %2 = memref.load %arg1[%c0] : memref<2xf32, #tpu.memory_space<smem>>
    %c0_1 = arith.constant 0 : index
    %c0_2 = arith.constant 0 : index
    %c0_3 = arith.constant 0 : index
    %3 = vector.load %arg3[%c0_1, %c0_2, %c0_3] : memref<2x2x32xf32, #tpu.memory_space<vmem>>, vector<1x2x32xf32>
    %4 = vector.shape_cast %3 : vector<1x2x32xf32> to vector<2x32xf32>
    %cst_4 = arith.constant 9.99999993E-9 : f32
    %5 = vector.broadcast %cst_4 : f32 to vector<2x32xf32>
    %6 = arith.addf %4, %5 : vector<2x32xf32>
    %7 = tpu.reciprocal %6 : vector<2x32xf32> -> vector<2x32xf32>
    %8 = vector.broadcast %2 : f32 to vector<2x32xf32>
    %9 = arith.mulf %8, %7 : vector<2x32xf32>
    %10 = arith.addf %0, %9 : vector<2x32xf32>
    %c0_5 = arith.constant 0 : index
    %c0_6 = arith.constant 0 : index
    %c0_7 = arith.constant 0 : index
    %11 = vector.load %arg2[%c0_5, %c0_6, %c0_7] : memref<2x2x32xf32, #tpu.memory_space<vmem>>, vector<1x2x32xf32>
    %12 = vector.shape_cast %11 : vector<1x2x32xf32> to vector<2x32xf32>
    %13 = arith.mulf %12, %9 : vector<2x32xf32>
    %14 = arith.addf %1, %13 : vector<2x32xf32>
    %c1 = arith.constant 1 : index
    %15 = memref.load %arg1[%c1] : memref<2xf32, #tpu.memory_space<smem>>
    %c1_8 = arith.constant 1 : index
    %c0_9 = arith.constant 0 : index
    %c0_10 = arith.constant 0 : index
    %16 = vector.load %arg3[%c1_8, %c0_9, %c0_10] : memref<2x2x32xf32, #tpu.memory_space<vmem>>, vector<1x2x32xf32>
    %17 = vector.shape_cast %16 : vector<1x2x32xf32> to vector<2x32xf32>
    %cst_11 = arith.constant 9.99999993E-9 : f32
    %18 = vector.broadcast %cst_11 : f32 to vector<2x32xf32>
    %19 = arith.addf %17, %18 : vector<2x32xf32>
    %20 = tpu.reciprocal %19 : vector<2x32xf32> -> vector<2x32xf32>
    %21 = vector.broadcast %15 : f32 to vector<2x32xf32>
    %22 = arith.mulf %21, %20 : vector<2x32xf32>
    %23 = arith.addf %10, %22 : vector<2x32xf32>
    %c1_12 = arith.constant 1 : index
    %c0_13 = arith.constant 0 : index
    %c0_14 = arith.constant 0 : index
    %24 = vector.load %arg2[%c1_12, %c0_13, %c0_14] : memref<2x2x32xf32, #tpu.memory_space<vmem>>, vector<1x2x32xf32>
    %25 = vector.shape_cast %24 : vector<1x2x32xf32> to vector<2x32xf32>
    %26 = arith.mulf %25, %22 : vector<2x32xf32>
    %27 = arith.addf %14, %26 : vector<2x32xf32>
    %28 = tpu.reciprocal %23 : vector<2x32xf32> -> vector<2x32xf32>
    %29 = arith.mulf %27, %28 : vector<2x32xf32>
    %30 = tpu.iota {dimensions = array<i32: 1>} : vector<32x256xi32>
    %31 = tpu.iota {dimensions = array<i32: 0>} : vector<32x256xi32>
    %c32_i32 = arith.constant 32 : i32
    %c0_i32 = arith.constant 0 : i32
    %32 = arith.cmpi eq, %c32_i32, %c0_i32 : i32
    %c1_i32 = arith.constant 1 : i32
    %33 = arith.select %32, %c1_i32, %c32_i32 : i32
    %34 = vector.broadcast %33 : i32 to vector<32x256xi32>
    %35 = arith.remsi %30, %34 : vector<32x256xi32>
    %c0_i32_15 = arith.constant 0 : i32
    %36 = vector.broadcast %c0_i32_15 : i32 to vector<32x256xi32>
    %37 = arith.cmpi ne, %35, %36 : vector<32x256xi32>
    %c0_i32_16 = arith.constant 0 : i32
    %38 = vector.broadcast %c0_i32_16 : i32 to vector<32x256xi32>
    %39 = arith.cmpi slt, %35, %38 : vector<32x256xi32>
    %c0_i32_17 = arith.constant 0 : i32
    %40 = arith.cmpi slt, %33, %c0_i32_17 : i32
    %41 = vector.broadcast %40 : i1 to vector<32x256xi1>
    %42 = vector.broadcast %41 : vector<32x256xi1> to vector<32x256xi1>
    %43 = arith.xori %39, %42 : vector<32x256xi1>
    %44 = arith.andi %43, %37 : vector<32x256xi1>
    %45 = vector.broadcast %33 : i32 to vector<32x256xi32>
    %46 = arith.addi %35, %45 : vector<32x256xi32>
    %47 = arith.select %44, %46, %35 : vector<32x256xi1>, vector<32x256xi32>
    %48 = arith.cmpi eq, %47, %31 : vector<32x256xi32>
    %49 = arith.extui %48 : vector<32x256xi1> to vector<32x256xi32>
    %50 = arith.sitofp %49 : vector<32x256xi32> to vector<32x256xf32>
    %cst_18 = arith.constant dense<0.000000e+00> : vector<2x256xf32>
    %51 = tpu.matmul %29, %50, %cst_18 {dimension_numbers = #tpu.dot_dimension_numbers<[1], [0], [0], [1], [0, 0, 1, 1], [], []>, precision = #tpu.contract_precision<fp32>} : vector<2x32xf32>, vector<32x256xf32>, vector<2x256xf32> -> vector<2x256xf32>
    %cst_19 = arith.constant dense<0.000000e+00> : vector<2x256xf32>
    %52 = tpu.matmul %28, %50, %cst_19 {dimension_numbers = #tpu.dot_dimension_numbers<[1], [0], [0], [1], [0, 0, 1, 1], [], []>, precision = #tpu.contract_precision<fp32>} : vector<2x32xf32>, vector<32x256xf32>, vector<2x256xf32> -> vector<2x256xf32>
    %c0_20 = arith.constant 0 : index
    %c0_21 = arith.constant 0 : index
    %53 = vector.load %arg4[%c0_20, %c0_21] : memref<2x256xf32, #tpu.memory_space<vmem>>, vector<2x256xf32>
    %54 = arith.mulf %52, %53 : vector<2x256xf32>
    %55 = arith.addf %51, %54 : vector<2x256xf32>
    %c0_22 = arith.constant 0 : index
    %c0_23 = arith.constant 0 : index
    %56 = vector.load %arg5[%c0_22, %c0_23] : memref<2x256xf32, #tpu.memory_space<vmem>>, vector<2x256xf32>
    tpu.vector_store %arg5[%c0_22, %c0_23], %55 {strides = array<i32>} : memref<2x256xf32, #tpu.memory_space<vmem>>, vector<2x256xf32>,
    return
  }
  func.func @transform_0(%arg0: i32) -> i32 {
    %c0_i32 = arith.constant 0 : i32
    %c0_i32_0 = arith.constant 0 : i32
    return %c0_i32 : i32
  }
  func.func @transform_1(%arg0: i32) -> (i32, i32, i32) {
    %c0_i32 = arith.constant 0 : i32
    %c0_i32_0 = arith.constant 0 : i32
    %c0_i32_1 = arith.constant 0 : i32
    return %c0_i32, %arg0, %c0_i32_0 : i32, i32, i32
  }
  func.func @transform_2(%arg0: i32) -> (i32, i32, i32) {
    %c0_i32 = arith.constant 0 : i32
    %c0_i32_0 = arith.constant 0 : i32
    %c0_i32_1 = arith.constant 0 : i32
    return %c0_i32, %arg0, %c0_i32_0 : i32, i32, i32
  }
  func.func @transform_3(%arg0: i32) -> (i32, i32) {
    %c0_i32 = arith.constant 0 : i32
    %c0_i32_0 = arith.constant 0 : i32
    return %arg0, %c0_i32 : i32, i32
  }
  func.func @transform_4(%arg0: i32) -> (i32, i32) {
    %c0_i32 = arith.constant 0 : i32
    %c0_i32_0 = arith.constant 0 : i32
    return %arg0, %c0_i32 : i32, i32
  }
}

</mosaic_0001>

<llo_original>
// kernel: tpu_custom_call.1
$region0: #{tpu_custom_call.1}
  #allocation0 [shape = 'u32[]', space=smem, size = 0x4, offset = 0x4, fixed_abs, tag = 'smem constant byte address 0x4 - core index']
  #allocation1 [shape = 'u32[144,128]{1,0:T(1,128)}', space=vmem, size = 0x12000, scoped, tag = 'internal scratch']
  %s0 = inlined_call_operand.hbm [shape: f32[2], index: 0, kind: input, shape index: {}]
  %s1 = inlined_call_operand.hbm [shape: f32[2,2,32], index: 1, kind: input, shape index: {}]
  %s2 = inlined_call_operand.vmem [shape: f32[2,2,32], index: 2, kind: input, shape index: {}]
  %s3 = inlined_call_operand.vmem [shape: f32[2,256], index: 3, kind: input, shape index: {}]
  %s4 = inlined_call_operand.hbm [shape: f32[2,256], index: 4, kind: output, shape index: {}]
  %s5 = sld [smem:[#allocation0]]
  $region34: #{tpu_custom_call.1} parent=0
    _
  %s7 = ssub.s32 1, %s5
  %s8 = scalar_select 0, %s7, %s5
  $region1: #{tpu_custom_call.1} parent=0
    #allocation2 [shape = 'u8[512]{0}', space=smem, size = 0x200, scoped, tag = 'input window, operand 0, single buffered']
    #allocation3 [shape = 's32[1]{0}', space=sflag, size = 0x4, scoped, tag = 'scoped memory for tpu_custom_call.1']
    #allocation4 [shape = 's32[1]{0}', space=sflag, size = 0x4, scoped, tag = 'scoped memory for tpu_custom_call.1']
    #allocation5 [shape = 's32[1]{0}', space=sflag, size = 0x4, scoped, tag = 'scoped memory for tpu_custom_call.1']
    #allocation6 [shape = 'u8[2048]{0}', space=vmem, size = 0x800, scoped, tag = 'input window, operand 1, single buffered']
    #allocation7 [shape = 'u8[2048]{0}', space=vmem, size = 0x800, scoped, tag = 'output window, operand 0, single buffered']
    %9 = vsyncpa [#allocation5], 0
    %10 = vsyncpa [#allocation3], 0
    %11 = vsyncpa [#allocation4], 0
    // Predicated region
    $region2: #{tpu_custom_call.1} parent=1 // pred_check
      _
    $region3: #{tpu_custom_call.1} parent=1 // pred_check_branch
      %13 = sbr.rel (0) target = $region5
    $region4: #{tpu_custom_call.1} parent=1 // pred_region
      %s15 = ssub.s32 16, 16
      %16 = vsyncadd [#allocation5], %s15
      %19 = dma.hbm_to_smem %s0, 16, [#allocation2], [#allocation5]
    $region5: #{tpu_custom_call.1} parent=1 // pred_fallthru
      _
    // Predicated region
    $region6: #{tpu_custom_call.1} parent=1 // pred_check
      _
    $region7: #{tpu_custom_call.1} parent=1 // pred_check_branch
      %21 = sbr.rel (0) target = $region9
    $region8: #{tpu_custom_call.1} parent=1 // pred_region
      %s23 = ssub.s32 64, 64
      %24 = vsyncadd [#allocation3], %s23
      %s25 = sshll.u32 [#allocation6], 4
      %s26 = int_to_ptr.vmem [resolvable:$true] %s25
      %31 = dma.hbm_to_vmem [thread:$0]  %s1, 64, %s26, [#allocation3], 32, 32, 2
    $region9: #{tpu_custom_call.1} parent=1 // pred_fallthru
      _
    // Predicated region
    $region10: #{tpu_custom_call.1} parent=1 // pred_check
      _
    $region11: #{tpu_custom_call.1} parent=1 // pred_check_branch
      %33 = sbr.rel (0) target = $region13
    $region12: #{tpu_custom_call.1} parent=1 // pred_region
      _
    $region13: #{tpu_custom_call.1} parent=1 // pred_fallthru
      _
    // Predicated region
    $region14: #{tpu_custom_call.1} parent=1 // pred_check
      _
    $region15: #{tpu_custom_call.1} parent=1 // pred_check_branch
      %35 = sbr.rel (0) target = $region17
    $region16: #{tpu_custom_call.1} parent=1 // pred_region
      _
    $region17: #{tpu_custom_call.1} parent=1 // pred_fallthru
      _
    // Predicated region
    $region18: #{tpu_custom_call.1} parent=1 // pred_check
      _
    $region19: #{tpu_custom_call.1} parent=1 // pred_check_branch
      %37 = sbr.rel (0) target = $region21
    $region20: #{tpu_custom_call.1} parent=1 // pred_region
      %38 = dma.done [#allocation5], 16
    $region21: #{tpu_custom_call.1} parent=1 // pred_fallthru
      _
    // Predicated region
    $region22: #{tpu_custom_call.1} parent=1 // pred_check
      _
    $region23: #{tpu_custom_call.1} parent=1 // pred_check_branch
      %40 = sbr.rel (0) target = $region25
    $region24: #{tpu_custom_call.1} parent=1 // pred_region
      %41 = dma.done [#allocation3], 64
    $region25: #{tpu_custom_call.1} parent=1 // pred_fallthru
      _
    %42 = sfence
    %s43 = sld [smem:[#allocation2]]
    %v44 = vld [vmem:[%s2] sm:$0x3]
    %v45 = vadd.f32 %v44, 1e-08
    %v46 = vrcp.pop %v45
    %v47 = vstv %s43
    %v48 = vmul.f32 %v47, %v46
    %v49 = vadd.f32 %v48, 0.0
    %v50 = vld [vmem:[#allocation6] sm:$0x3]
    %v51 = vmul.f32 %v50, %v48
    %v52 = vadd.f32 %v51, 0.0
    %s53 = sld [smem:[#allocation2 + $0x1]]
    %s54 = scalar_lea.vmem %s2, 2
    %v55 = vld [vmem:[%s54] sm:$0x3]
    %v56 = vadd.f32 %v55, 1e-08
    %v57 = vrcp.pop %v56
    %v58 = vstv %s53
    %v59 = vmul.f32 %v58, %v57
    %v60 = vadd.f32 %v49, %v59
    %s61 = scalar_lea.vmem [#allocation6], 2
    %v62 = vld [vmem:[%s61] sm:$0x3]
    %v63 = vmul.f32 %v62, %v59
    %v64 = vadd.f32 %v52, %v63
    %v65 = vrcp.pop %v60
    %v66 = vmul.f32 %v64, %v65
    %v67 = vlaneseq
    %v68 = vand.u32 %v67, 127
    %v69 = vadd.s32 %v68, 128
    %v70 = vlaneseq
    %v71 = vshrl.u32 %v70, 7
    %v72 = vadd.s32 %v71, 8
    %v73 = vadd.s32 %v71, 16
    %v74 = vadd.s32 %v71, 24
    %vm75 = vcmp.lt.s32.totalorder %v68, 0
    %v76 = vsub.s32 0, %v68
    %v77 = vsel %vm75, %v76, %v68
    %v78 = vshrl.u32 %v77, 5
    %v79 = vand.u32 %v77, 31
    %v80 = vsub.s32 0, %v79
    %v81 = vsel %vm75, %v80, %v79
    %vm82 = vcmp.lt.s32.totalorder %v69, 0
    %v83 = vsub.s32 0, %v69
    %v84 = vsel %vm82, %v83, %v69
    %v85 = vshrl.u32 %v84, 5
    %v86 = vand.u32 %v84, 31
    %v87 = vsub.s32 0, %v86
    %v88 = vsel %vm82, %v87, %v86
    %vm89 = vcmp.ne.s32.totalorder %v81, 0
    %vm90 = vcmp.ne.s32.totalorder %v88, 0
    %vm91 = vcmp.lt.s32.totalorder %v81, 0
    %vm92 = vcmp.lt.s32.totalorder %v88, 0
    %vm93 = vmand %vm91, %vm89
    %vm94 = vmand %vm92, %vm90
    %v95 = vadd.s32 %v81, 32
    %v96 = vadd.s32 %v88, 32
    %v97 = vsel %vm93, %v95, %v81
    %v98 = vsel %vm94, %v96, %v88
    %vm99 = vcmp.eq.s32.totalorder %v97, %v71
    %vm100 = vcmp.eq.s32.totalorder %v98, %v71
    %vm101 = vcmp.eq.s32.totalorder %v97, %v72
    %vm102 = vcmp.eq.s32.totalorder %v98, %v72
    %vm103 = vcmp.eq.s32.totalorder %v97, %v73
    %vm104 = vcmp.eq.s32.totalorder %v98, %v73
    %vm105 = vcmp.eq.s32.totalorder %v97, %v74
    %vm106 = vcmp.eq.s32.totalorder %v98, %v74
    %v107 = vsel %vm99, 1, 0
    %v108 = vsel %vm100, 1, 0
    %v109 = vsel %vm101, 1, 0
    %v110 = vsel %vm102, 1, 0
    %v111 = vsel %vm103, 1, 0
    %v112 = vsel %vm104, 1, 0
    %v113 = vsel %vm105, 1, 0
    %v114 = vsel %vm106, 1, 0
    %v115 = vcvt.s32.f32 %v107
    %v116 = vcvt.s32.f32 %v108
    %v117 = vcvt.s32.f32 %v109
    %v118 = vcvt.s32.f32 %v110
    %v119 = vcvt.s32.f32 %v111
    %v120 = vcvt.s32.f32 %v112
    %v121 = vcvt.s32.f32 %v113
    %v122 = vcvt.s32.f32 %v114
    %vm123 = vcmask 261120
    %v125 = vsel %vm123, %v65, 0
    %v127 = vand.u32 %v116, 4294901760
    %128 = vmatprep.subr.mxu0 %v127
    %v129 = vand.u32 %v115, 4294901760
    %130 = vmatpush1.msra.mxu0 %v129
    %v131 = vand.u32 %v118, 4294901760
    %132 = vmatprep.subr.mxu0 %v131
    %v133 = vand.u32 %v117, 4294901760
    %134 = vmatpush1.msra.mxu0 %v133
    %v135 = vand.u32 %v120, 4294901760
    %136 = vmatprep.subr.mxu0 %v135
    %v137 = vand.u32 %v119, 4294901760
    %138 = vmatpush1.msra.mxu0 %v137
    %v139 = vand.u32 %v122, 4294901760
    %140 = vmatprep.subr.mxu0 %v139
    %v141 = vand.u32 %v121, 4294901760
    %142 = vmatpush1.msra.mxu0 %v141
    %143 = vmatprep.subr.mxu0 0.0
    %144 = vmatpush1.msra.mxu0 0.0
    %145 = vmatprep.subr.mxu0 0.0
    %146 = vmatpush1.msra.mxu0 0.0
    %147 = vmatprep.subr.mxu0 0.0
    %148 = vmatpush1.msra.mxu0 0.0
    %149 = vmatprep.subr.mxu0 0.0
    %150 = vmatpush1.msra.mxu0 0.0
    %151 = vmatprep.subr.mxu0 0.0
    %152 = vmatpush1.msra.mxu0 0.0
    %153 = vmatprep.subr.mxu0 0.0
    %154 = vmatpush1.msra.mxu0 0.0
    %155 = vmatprep.subr.mxu0 0.0
    %156 = vmatpush1.msra.mxu0 0.0
    %157 = vmatprep.subr.mxu0 0.0
    %158 = vmatpush1.msra.mxu0 0.0
    %159 = vmatprep.subr.mxu0 0.0
    %160 = vmatpush1.msra.mxu0 0.0
    %161 = vmatprep.subr.mxu0 0.0
    %162 = vmatpush1.msra.mxu0 0.0
    %163 = vmatprep.subr.mxu0 0.0
    %164 = vmatpush1.msra.mxu0 0.0
    %165 = vmatprep.subr.mxu0 0.0
    %166 = vmatpush1.msra.mxu0 0.0
    %167 = vmatprep.subr.mxu0 0.0
    %168 = vmatpush1.msra.mxu0 0.0
    %169 = vmatprep.subr.mxu0 0.0
    %170 = vmatpush1.msra.mxu0 0.0
    %171 = vmatprep.subr.mxu0 0.0
    %172 = vmatpush1.msra.mxu0 0.0
    %173 = vmatprep.subr.mxu0 0.0
    %174 = vmatpush1.msra.mxu0 0.0
    %175 = vmatprep.subr.mxu0 0.0
    %176 = vmatpush1.msra.mxu0 0.0
    %177 = vmatprep.subr.mxu0 0.0
    %178 = vmatpush1.msra.mxu0 0.0
    %179 = vmatprep.subr.mxu0 0.0
    %180 = vmatpush1.msra.mxu0 0.0
    %181 = vmatprep.subr.mxu0 0.0
    %182 = vmatpush1.msra.mxu0 0.0
    %183 = vmatprep.subr.mxu0 0.0
    %184 = vmatpush1.msra.mxu0 0.0
    %185 = vmatprep.subr.mxu0 0.0
    %186 = vmatpush1.msra.mxu0 0.0
    %187 = vmatprep.subr.mxu0 0.0
    %188 = vmatpush1.msra.mxu0 0.0
    %189 = vmatprep.subr.mxu0 0.0
    %190 = vmatpush1.msra.mxu0 0.0
    %191 = vmatprep.subr.mxu0 0.0
    %192 = vmatpush1.msra.mxu0 0.0
    %193 = vmatprep.subr.mxu0 0.0
    %194 = vmatpush1.msra.mxu0 0.0
    %195 = vmatprep.subr.mxu0 0.0
    %196 = vmatpush1.msra.mxu0 0.0
    %197 = vmatprep.subr.mxu0 0.0
    %198 = vmatpush1.msra.mxu0 0.0
    %199 = vmatprep.mubr.f32.mxu0 0.0
    %v200 = vand.u32 %v125, 4294901760
    %v201 = vsub.f32 %v125, %v200
    %v202 = vand.u32 %v201, 4294901760
    %v203 = vsub.f32 %v201, %v202
    %v204 = vand.u32 %v203, 4294901760
    %205 = vmatmul.mubr.f32.gmra.mrb[0].mxu0 %v204
    %v206 = vpop.f32.mrb[0].mxu0
    %v207 = vadd.f32 0.0, %v206
    %v208 = vpop.f32.mrb[0].mxu0
    %v209 = vadd.f32 0.0, %v208
    %210 = vdwg.mxu0
    %v211 = vand.u32 %v116, 4294901760
    %v212 = vsub.f32 %v116, %v211
    %v213 = vand.u32 %v212, 4294901760
    %v214 = vsub.f32 %v212, %v213
    %v215 = vand.u32 %v214, 4294901760
    %216 = vmatprep.subr.mxu0 %v215
    %v217 = vand.u32 %v115, 4294901760
    %v218 = vsub.f32 %v115, %v217
    %v219 = vand.u32 %v218, 4294901760
    %v220 = vsub.f32 %v218, %v219
    %v221 = vand.u32 %v220, 4294901760
    %222 = vmatpush1.msra.mxu0 %v221
    %v223 = vand.u32 %v118, 4294901760
    %v224 = vsub.f32 %v118, %v223
    %v225 = vand.u32 %v224, 4294901760
    %v226 = vsub.f32 %v224, %v225
    %v227 = vand.u32 %v226, 4294901760
    %228 = vmatprep.subr.mxu0 %v227
    %v229 = vand.u32 %v117, 4294901760
    %v230 = vsub.f32 %v117, %v229
    %v231 = vand.u32 %v230, 4294901760
    %v232 = vsub.f32 %v230, %v231
    %v233 = vand.u32 %v232, 4294901760
    %234 = vmatpush1.msra.mxu0 %v233
    %v235 = vand.u32 %v120, 4294901760
    %v236 = vsub.f32 %v120, %v235
    %v237 = vand.u32 %v236, 4294901760
    %v238 = vsub.f32 %v236, %v237
    %v239 = vand.u32 %v238, 4294901760
    %240 = vmatprep.subr.mxu0 %v239
    %v241 = vand.u32 %v119, 4294901760
    %v242 = vsub.f32 %v119, %v241
    %v243 = vand.u32 %v242, 4294901760
    %v244 = vsub.f32 %v242, %v243
    %v245 = vand.u32 %v244, 4294901760
    %246 = vmatpush1.msra.mxu0 %v245
    %v247 = vand.u32 %v122, 4294901760
    %v248 = vsub.f32 %v122, %v247
    %v249 = vand.u32 %v248, 4294901760
    %v250 = vsub.f32 %v248, %v249
    %v251 = vand.u32 %v250, 4294901760
    %252 = vmatprep.subr.mxu0 %v251
    %v253 = vand.u32 %v121, 4294901760
    %v254 = vsub.f32 %v121, %v253
    %v255 = vand.u32 %v254, 4294901760
    %v256 = vsub.f32 %v254, %v255
    %v257 = vand.u32 %v256, 4294901760
    %258 = vmatpush1.msra.mxu0 %v257
    %259 = vmatprep.subr.mxu0 0.0
    %260 = vmatpush1.msra.mxu0 0.0
    %261 = vmatprep.subr.mxu0 0.0
    %262 = vmatpush1.msra.mxu0 0.0
    %263 = vmatprep.subr.mxu0 0.0
    %264 = vmatpush1.msra.mxu0 0.0
    %265 = vmatprep.subr.mxu0 0.0
    %266 = vmatpush1.msra.mxu0 0.0
    %267 = vmatprep.subr.mxu0 0.0
    %268 = vmatpush1.msra.mxu0 0.0
    %269 = vmatprep.subr.mxu0 0.0
    %270 = vmatpush1.msra.mxu0 0.0
    %271 = vmatprep.subr.mxu0 0.0
    %272 = vmatpush1.msra.mxu0 0.0
    %273 = vmatprep.subr.mxu0 0.0
    %274 = vmatpush1.msra.mxu0 0.0
    %275 = vmatprep.subr.mxu0 0.0
    %276 = vmatpush1.msra.mxu0 0.0
    %277 = vmatprep.subr.mxu0 0.0
    %278 = vmatpush1.msra.mxu0 0.0
    %279 = vmatprep.subr.mxu0 0.0
    %280 = vmatpush1.msra.mxu0 0.0
    %281 = vmatprep.subr.mxu0 0.0
    %282 = vmatpush1.msra.mxu0 0.0
    %283 = vmatprep.subr.mxu0 0.0
    %284 = vmatpush1.msra.mxu0 0.0
    %285 = vmatprep.subr.mxu0 0.0
    %286 = vmatpush1.msra.mxu0 0.0
    %287 = vmatprep.subr.mxu0 0.0
    %288 = vmatpush1.msra.mxu0 0.0
    %289 = vmatprep.subr.mxu0 0.0
    %290 = vmatpush1.msra.mxu0 0.0
    %291 = vmatprep.subr.mxu0 0.0
    %292 = vmatpush1.msra.mxu0 0.0
    %293 = vmatprep.subr.mxu0 0.0
    %294 = vmatpush1.msra.mxu0 0.0
    %295 = vmatprep.subr.mxu0 0.0
    %296 = vmatpush1.msra.mxu0 0.0
    %297 = vmatprep.subr.mxu0 0.0
    %298 = vmatpush1.msra.mxu0 0.0
    %299 = vmatprep.subr.mxu0 0.0
    %300 = vmatpush1.msra.mxu0 0.0
    %301 = vmatprep.subr.mxu0 0.0
    %302 = vmatpush1.msra.mxu0 0.0
    %303 = vmatprep.subr.mxu0 0.0
    %304 = vmatpush1.msra.mxu0 0.0
    %305 = vmatprep.subr.mxu0 0.0
    %306 = vmatpush1.msra.mxu0 0.0
    %307 = vmatprep.subr.mxu0 0.0
    %308 = vmatpush1.msra.mxu0 0.0
    %309 = vmatprep.subr.mxu0 0.0
    %310 = vmatpush1.msra.mxu0 0.0
    %311 = vmatprep.subr.mxu0 0.0
    %312 = vmatpush1.msra.mxu0 0.0
    %313 = vmatprep.subr.mxu0 0.0
    %314 = vmatpush1.msra.mxu0 0.0
    %315 = vmatprep.mubr.f32.mxu0 0.0
    %v316 = vand.u32 %v125, 4294901760
    %317 = vmatmul.mubr.f32.gmra.mrb[0].mxu0 %v316
    %v318 = vpop.f32.mrb[0].mxu0
    %v319 = vadd.f32 %v207, %v318
    %v320 = vpop.f32.mrb[0].mxu0
    %v321 = vadd.f32 %v209, %v320
    %322 = vdwg.mxu0
    %v323 = vand.u32 %v116, 4294901760
    %v324 = vsub.f32 %v116, %v323
    %325 = vmatprep.subr.mxu0 %v324
    %v326 = vand.u32 %v115, 4294901760
    %v327 = vsub.f32 %v115, %v326
    %328 = vmatpush1.msra.mxu0 %v327
    %v329 = vand.u32 %v118, 4294901760
    %v330 = vsub.f32 %v118, %v329
    %331 = vmatprep.subr.mxu0 %v330
    %v332 = vand.u32 %v117, 4294901760
    %v333 = vsub.f32 %v117, %v332
    %334 = vmatpush1.msra.mxu0 %v333
    %v335 = vand.u32 %v120, 4294901760
    %v336 = vsub.f32 %v120, %v335
    %337 = vmatprep.subr.mxu0 %v336
    %v338 = vand.u32 %v119, 4294901760
    %v339 = vsub.f32 %v119, %v338
    %340 = vmatpush1.msra.mxu0 %v339
    %v341 = vand.u32 %v122, 4294901760
    %v342 = vsub.f32 %v122, %v341
    %343 = vmatprep.subr.mxu0 %v342
    %v344 = vand.u32 %v121, 4294901760
    %v345 = vsub.f32 %v121, %v344
    %346 = vmatpush1.msra.mxu0 %v345
    %347 = vmatprep.subr.mxu0 0.0
    %348 = vmatpush1.msra.mxu0 0.0
    %349 = vmatprep.subr.mxu0 0.0
    %350 = vmatpush1.msra.mxu0 0.0
    %351 = vmatprep.subr.mxu0 0.0
    %352 = vmatpush1.msra.mxu0 0.0
    %353 = vmatprep.subr.mxu0 0.0
    %354 = vmatpush1.msra.mxu0 0.0
    %355 = vmatprep.subr.mxu0 0.0
    %356 = vmatpush1.msra.mxu0 0.0
    %357 = vmatprep.subr.mxu0 0.0
    %358 = vmatpush1.msra.mxu0 0.0
    %359 = vmatprep.subr.mxu0 0.0
    %360 = vmatpush1.msra.mxu0 0.0
    %361 = vmatprep.subr.mxu0 0.0
    %362 = vmatpush1.msra.mxu0 0.0
    %363 = vmatprep.subr.mxu0 0.0
    %364 = vmatpush1.msra.mxu0 0.0
    %365 = vmatprep.subr.mxu0 0.0
    %366 = vmatpush1.msra.mxu0 0.0
    %367 = vmatprep.subr.mxu0 0.0
    %368 = vmatpush1.msra.mxu0 0.0
    %369 = vmatprep.subr.mxu0 0.0
    %370 = vmatpush1.msra.mxu0 0.0
    %371 = vmatprep.subr.mxu0 0.0
    %372 = vmatpush1.msra.mxu0 0.0
    %373 = vmatprep.subr.mxu0 0.0
    %374 = vmatpush1.msra.mxu0 0.0
    %375 = vmatprep.subr.mxu0 0.0
    %376 = vmatpush1.msra.mxu0 0.0
    %377 = vmatprep.subr.mxu0 0.0
    %378 = vmatpush1.msra.mxu0 0.0
    %379 = vmatprep.subr.mxu0 0.0
    %380 = vmatpush1.msra.mxu0 0.0
    %381 = vmatprep.subr.mxu0 0.0
    %382 = vmatpush1.msra.mxu0 0.0
    %383 = vmatprep.subr.mxu0 0.0
    %384 = vmatpush1.msra.mxu0 0.0
    %385 = vmatprep.subr.mxu0 0.0
    %386 = vmatpush1.msra.mxu0 0.0
    %387 = vmatprep.subr.mxu0 0.0
    %388 = vmatpush1.msra.mxu0 0.0
    %389 = vmatprep.subr.mxu0 0.0
    %390 = vmatpush1.msra.mxu0 0.0
    %391 = vmatprep.subr.mxu0 0.0
    %392 = vmatpush1.msra.mxu0 0.0
    %393 = vmatprep.subr.mxu0 0.0
    %394 = vmatpush1.msra.mxu0 0.0
    %395 = vmatprep.subr.mxu0 0.0
    %396 = vmatpush1.msra.mxu0 0.0
    %397 = vmatprep.subr.mxu0 0.0
    %398 = vmatpush1.msra.mxu0 0.0
    %399 = vmatprep.subr.mxu0 0.0
    %400 = vmatpush1.msra.mxu0 0.0
    %401 = vmatprep.subr.mxu0 0.0
    %402 = vmatpush1.msra.mxu0 0.0
    %403 = vmatprep.mubr.f32.mxu0 0.0
    %v404 = vand.u32 %v125, 4294901760
    %v405 = vsub.f32 %v125, %v404
    %406 = vmatmul.mubr.f32.gmra.mrb[0].mxu0 %v405
    %v407 = vpop.f32.mrb[0].mxu0
    %v408 = vadd.f32 %v319, %v407
    %v409 = vpop.f32.mrb[0].mxu0
    %v410 = vadd.f32 %v321, %v409
    %411 = vdwg.mxu0
    %v412 = vand.u32 %v116, 4294901760
    %413 = vmatprep.subr.mxu0 %v412
    %v414 = vand.u32 %v115, 4294901760
    %415 = vmatpush1.msra.mxu0 %v414
    %v416 = vand.u32 %v118, 4294901760
    %417 = vmatprep.subr.mxu0 %v416
    %v418 = vand.u32 %v117, 4294901760
    %419 = vmatpush1.msra.mxu0 %v418
    %v420 = vand.u32 %v120, 4294901760
    %421 = vmatprep.subr.mxu0 %v420
    %v422 = vand.u32 %v119, 4294901760
    %423 = vmatpush1.msra.mxu0 %v422
    %v424 = vand.u32 %v122, 4294901760
    %425 = vmatprep.subr.mxu0 %v424
    %v426 = vand.u32 %v121, 4294901760
    %427 = vmatpush1.msra.mxu0 %v426
    %428 = vmatprep.subr.mxu0 0.0
    %429 = vmatpush1.msra.mxu0 0.0
    %430 = vmatprep.subr.mxu0 0.0
    %431 = vmatpush1.msra.mxu0 0.0
    %432 = vmatprep.subr.mxu0 0.0
    %433 = vmatpush1.msra.mxu0 0.0
    %434 = vmatprep.subr.mxu0 0.0
    %435 = vmatpush1.msra.mxu0 0.0
    %436 = vmatprep.subr.mxu0 0.0
    %437 = vmatpush1.msra.mxu0 0.0
    %438 = vmatprep.subr.mxu0 0.0
    %439 = vmatpush1.msra.mxu0 0.0
    %440 = vmatprep.subr.mxu0 0.0
    %441 = vmatpush1.msra.mxu0 0.0
    %442 = vmatprep.subr.mxu0 0.0
    %443 = vmatpush1.msra.mxu0 0.0
    %444 = vmatprep.subr.mxu0 0.0
    %445 = vmatpush1.msra.mxu0 0.0
    %446 = vmatprep.subr.mxu0 0.0
    %447 = vmatpush1.msra.mxu0 0.0
    %448 = vmatprep.subr.mxu0 0.0
    %449 = vmatpush1.msra.mxu0 0.0
    %450 = vmatprep.subr.mxu0 0.0
    %451 = vmatpush1.msra.mxu0 0.0
    %452 = vmatprep.subr.mxu0 0.0
    %453 = vmatpush1.msra.mxu0 0.0
    %454 = vmatprep.subr.mxu0 0.0
    %455 = vmatpush1.msra.mxu0 0.0
    %456 = vmatprep.subr.mxu0 0.0
    %457 = vmatpush1.msra.mxu0 0.0
    %458 = vmatprep.subr.mxu0 0.0
    %459 = vmatpush1.msra.mxu0 0.0
    %460 = vmatprep.subr.mxu0 0.0
    %461 = vmatpush1.msra.mxu0 0.0
    %462 = vmatprep.subr.mxu0 0.0
    %463 = vmatpush1.msra.mxu0 0.0
    %464 = vmatprep.subr.mxu0 0.0
    %465 = vmatpush1.msra.mxu0 0.0
    %466 = vmatprep.subr.mxu0 0.0
    %467 = vmatpush1.msra.mxu0 0.0
    %468 = vmatprep.subr.mxu0 0.0
    %469 = vmatpush1.msra.mxu0 0.0
    %470 = vmatprep.subr.mxu0 0.0
    %471 = vmatpush1.msra.mxu0 0.0
    %472 = vmatprep.subr.mxu0 0.0
    %473 = vmatpush1.msra.mxu0 0.0
    %474 = vmatprep.subr.mxu0 0.0
    %475 = vmatpush1.msra.mxu0 0.0
    %476 = vmatprep.subr.mxu0 0.0
    %477 = vmatpush1.msra.mxu0 0.0
    %478 = vmatprep.subr.mxu0 0.0
    %479 = vmatpush1.msra.mxu0 0.0
    %480 = vmatprep.subr.mxu0 0.0
    %481 = vmatpush1.msra.mxu0 0.0
    %482 = vmatprep.subr.mxu0 0.0
    %483 = vmatpush1.msra.mxu0 0.0
    %484 = vmatprep.mubr.f32.mxu0 0.0
    %v485 = vand.u32 %v125, 4294901760
    %v486 = vsub.f32 %v125, %v485
    %v487 = vand.u32 %v486, 4294901760
    %488 = vmatmul.mubr.f32.gmra.mrb[0].mxu0 %v487
    %v489 = vpop.f32.mrb[0].mxu0
    %v490 = vadd.f32 %v408, %v489
    %v491 = vpop.f32.mrb[0].mxu0
    %v492 = vadd.f32 %v410, %v491
    %493 = vdwg.mxu0
    %v494 = vand.u32 %v116, 4294901760
    %v495 = vsub.f32 %v116, %v494
    %v496 = vand.u32 %v495, 4294901760
    %497 = vmatprep.subr.mxu0 %v496
    %v498 = vand.u32 %v115, 4294901760
    %v499 = vsub.f32 %v115, %v498
    %v500 = vand.u32 %v499, 4294901760
    %501 = vmatpush1.msra.mxu0 %v500
    %v502 = vand.u32 %v118, 4294901760
    %v503 = vsub.f32 %v118, %v502
    %v504 = vand.u32 %v503, 4294901760
    %505 = vmatprep.subr.mxu0 %v504
    %v506 = vand.u32 %v117, 4294901760
    %v507 = vsub.f32 %v117, %v506
    %v508 = vand.u32 %v507, 4294901760
    %509 = vmatpush1.msra.mxu0 %v508
    %v510 = vand.u32 %v120, 4294901760
    %v511 = vsub.f32 %v120, %v510
    %v512 = vand.u32 %v511, 4294901760
    %513 = vmatprep.subr.mxu0 %v512
    %v514 = vand.u32 %v119, 4294901760
    %v515 = vsub.f32 %v119, %v514
    %v516 = vand.u32 %v515, 4294901760
    %517 = vmatpush1.msra.mxu0 %v516
    %v518 = vand.u32 %v122, 4294901760
    %v519 = vsub.f32 %v122, %v518
    %v520 = vand.u32 %v519, 4294901760
    %521 = vmatprep.subr.mxu0 %v520
    %v522 = vand.u32 %v121, 4294901760
    %v523 = vsub.f32 %v121, %v522
    %v524 = vand.u32 %v523, 4294901760
    %525 = vmatpush1.msra.mxu0 %v524
    %526 = vmatprep.subr.mxu0 0.0
    %527 = vmatpush1.msra.mxu0 0.0
    %528 = vmatprep.subr.mxu0 0.0
    %529 = vmatpush1.msra.mxu0 0.0
    %530 = vmatprep.subr.mxu0 0.0
    %531 = vmatpush1.msra.mxu0 0.0
    %532 = vmatprep.subr.mxu0 0.0
    %533 = vmatpush1.msra.mxu0 0.0
    %534 = vmatprep.subr.mxu0 0.0
    %535 = vmatpush1.msra.mxu0 0.0
    %536 = vmatprep.subr.mxu0 0.0
    %537 = vmatpush1.msra.mxu0 0.0
    %538 = vmatprep.subr.mxu0 0.0
    %539 = vmatpush1.msra.mxu0 0.0
    %540 = vmatprep.subr.mxu0 0.0
    %541 = vmatpush1.msra.mxu0 0.0
    %542 = vmatprep.subr.mxu0 0.0
    %543 = vmatpush1.msra.mxu0 0.0
    %544 = vmatprep.subr.mxu0 0.0
    %545 = vmatpush1.msra.mxu0 0.0
    %546 = vmatprep.subr.mxu0 0.0
    %547 = vmatpush1.msra.mxu0 0.0
    %548 = vmatprep.subr.mxu0 0.0
    %549 = vmatpush1.msra.mxu0 0.0
    %550 = vmatprep.subr.mxu0 0.0
    %551 = vmatpush1.msra.mxu0 0.0
    %552 = vmatprep.subr.mxu0 0.0
    %553 = vmatpush1.msra.mxu0 0.0
    %554 = vmatprep.subr.mxu0 0.0
    %555 = vmatpush1.msra.mxu0 0.0
    %556 = vmatprep.subr.mxu0 0.0
    %557 = vmatpush1.msra.mxu0 0.0
    %558 = vmatprep.subr.mxu0 0.0
    %559 = vmatpush1.msra.mxu0 0.0
    %560 = vmatprep.subr.mxu0 0.0
    %561 = vmatpush1.msra.mxu0 0.0
    %562 = vmatprep.subr.mxu0 0.0
    %563 = vmatpush1.msra.mxu0 0.0
    %564 = vmatprep.subr.mxu0 0.0
    %565 = vmatpush1.msra.mxu0 0.0
    %566 = vmatprep.subr.mxu0 0.0
    %567 = vmatpush1.msra.mxu0 0.0
    %568 = vmatprep.subr.mxu0 0.0
    %569 = vmatpush1.msra.mxu0 0.0
    %570 = vmatprep.subr.mxu0 0.0
    %571 = vmatpush1.msra.mxu0 0.0
    %572 = vmatprep.subr.mxu0 0.0
    %573 = vmatpush1.msra.mxu0 0.0
    %574 = vmatprep.subr.mxu0 0.0
    %575 = vmatpush1.msra.mxu0 0.0
    %576 = vmatprep.subr.mxu0 0.0
    %577 = vmatpush1.msra.mxu0 0.0
    %578 = vmatprep.subr.mxu0 0.0
    %579 = vmatpush1.msra.mxu0 0.0
    %580 = vmatprep.subr.mxu0 0.0
    %581 = vmatpush1.msra.mxu0 0.0
    %582 = vmatprep.mubr.f32.mxu0 0.0
    %v583 = vand.u32 %v125, 4294901760
    %584 = vmatmul.mubr.f32.gmra.mrb[0].mxu0 %v583
    %v585 = vpop.f32.mrb[0].mxu0
    %v586 = vadd.f32 %v490, %v585
    %v587 = vpop.f32.mrb[0].mxu0
    %v588 = vadd.f32 %v492, %v587
    %589 = vdwg.mxu0
    %v590 = vand.u32 %v116, 4294901760
    %591 = vmatprep.subr.mxu0 %v590
    %v592 = vand.u32 %v115, 4294901760
    %593 = vmatpush1.msra.mxu0 %v592
    %v594 = vand.u32 %v118, 4294901760
    %595 = vmatprep.subr.mxu0 %v594
    %v596 = vand.u32 %v117, 4294901760
    %597 = vmatpush1.msra.mxu0 %v596
    %v598 = vand.u32 %v120, 4294901760
    %599 = vmatprep.subr.mxu0 %v598
    %v600 = vand.u32 %v119, 4294901760
    %601 = vmatpush1.msra.mxu0 %v600
    %v602 = vand.u32 %v122, 4294901760
    %603 = vmatprep.subr.mxu0 %v602
    %v604 = vand.u32 %v121, 4294901760
    %605 = vmatpush1.msra.mxu0 %v604
    %606 = vmatprep.subr.mxu0 0.0
    %607 = vmatpush1.msra.mxu0 0.0
    %608 = vmatprep.subr.mxu0 0.0
    %609 = vmatpush1.msra.mxu0 0.0
    %610 = vmatprep.subr.mxu0 0.0
    %611 = vmatpush1.msra.mxu0 0.0
    %612 = vmatprep.subr.mxu0 0.0
    %613 = vmatpush1.msra.mxu0 0.0
    %614 = vmatprep.subr.mxu0 0.0
    %615 = vmatpush1.msra.mxu0 0.0
    %616 = vmatprep.subr.mxu0 0.0
    %617 = vmatpush1.msra.mxu0 0.0
    %618 = vmatprep.subr.mxu0 0.0
    %619 = vmatpush1.msra.mxu0 0.0
    %620 = vmatprep.subr.mxu0 0.0
    %621 = vmatpush1.msra.mxu0 0.0
    %622 = vmatprep.subr.mxu0 0.0
    %623 = vmatpush1.msra.mxu0 0.0
    %624 = vmatprep.subr.mxu0 0.0
    %625 = vmatpush1.msra.mxu0 0.0
    %626 = vmatprep.subr.mxu0 0.0
    %627 = vmatpush1.msra.mxu0 0.0
    %628 = vmatprep.subr.mxu0 0.0
    %629 = vmatpush1.msra.mxu0 0.0
    %630 = vmatprep.subr.mxu0 0.0
    %631 = vmatpush1.msra.mxu0 0.0
    %632 = vmatprep.subr.mxu0 0.0
    %633 = vmatpush1.msra.mxu0 0.0
    %634 = vmatprep.subr.mxu0 0.0
    %635 = vmatpush1.msra.mxu0 0.0
    %636 = vmatprep.subr.mxu0 0.0
    %637 = vmatpush1.msra.mxu0 0.0
    %638 = vmatprep.subr.mxu0 0.0
    %639 = vmatpush1.msra.mxu0 0.0
    %640 = vmatprep.subr.mxu0 0.0
    %641 = vmatpush1.msra.mxu0 0.0
    %642 = vmatprep.subr.mxu0 0.0
    %643 = vmatpush1.msra.mxu0 0.0
    %644 = vmatprep.subr.mxu0 0.0
    %645 = vmatpush1.msra.mxu0 0.0
    %646 = vmatprep.subr.mxu0 0.0
    %647 = vmatpush1.msra.mxu0 0.0
    %648 = vmatprep.subr.mxu0 0.0
    %649 = vmatpush1.msra.mxu0 0.0
    %650 = vmatprep.subr.mxu0 0.0
    %651 = vmatpush1.msra.mxu0 0.0
    %652 = vmatprep.subr.mxu0 0.0
    %653 = vmatpush1.msra.mxu0 0.0
    %654 = vmatprep.subr.mxu0 0.0
    %655 = vmatpush1.msra.mxu0 0.0
    %656 = vmatprep.subr.mxu0 0.0
    %657 = vmatpush1.msra.mxu0 0.0
    %658 = vmatprep.subr.mxu0 0.0
    %659 = vmatpush1.msra.mxu0 0.0
    %660 = vmatprep.subr.mxu0 0.0
    %661 = vmatpush1.msra.mxu0 0.0
    %662 = vmatprep.mubr.f32.mxu0 0.0
    %v663 = vand.u32 %v125, 4294901760
    %664 = vmatmul.mubr.f32.gmra.mrb[0].mxu0 %v663
    %v665 = vpop.f32.mrb[0].mxu0
    %v666 = vadd.f32 %v586, %v665
    %v667 = vpop.f32.mrb[0].mxu0
    %v668 = vadd.f32 %v588, %v667
    %669 = vdwg.mxu0
    %v670 = vld [vmem:[%s3] sm:$0xf]
    %v673 = vunpack.c.l.s4 1983009808
    %v674 = vunpack.c.0.s8 %v673
    %v675 = vlaneseq
    %v676 = vshrl.u32 %v675, 7
    %v677 = vsub.s32 %v674, %v676
    %v678 = vrot.slane %v670, %v677
    %v679 = vcombine.high %v678, %v678
    %v682 = vmul.f32 %v666, %v678
    %v683 = vmul.f32 %v668, %v679
    %v685 = vsel %vm123, %v66, 0
    %v687 = vand.u32 %v116, 4294901760
    %688 = vmatprep.subr.mxu0 %v687
    %v689 = vand.u32 %v115, 4294901760
    %690 = vmatpush1.msra.mxu0 %v689
    %v691 = vand.u32 %v118, 4294901760
    %692 = vmatprep.subr.mxu0 %v691
    %v693 = vand.u32 %v117, 4294901760
    %694 = vmatpush1.msra.mxu0 %v693
    %v695 = vand.u32 %v120, 4294901760
    %696 = vmatprep.subr.mxu0 %v695
    %v697 = vand.u32 %v119, 4294901760
    %698 = vmatpush1.msra.mxu0 %v697
    %v699 = vand.u32 %v122, 4294901760
    %700 = vmatprep.subr.mxu0 %v699
    %v701 = vand.u32 %v121, 4294901760
    %702 = vmatpush1.msra.mxu0 %v701
    %703 = vmatprep.subr.mxu0 0.0
    %704 = vmatpush1.msra.mxu0 0.0
    %705 = vmatprep.subr.mxu0 0.0
    %706 = vmatpush1.msra.mxu0 0.0
    %707 = vmatprep.subr.mxu0 0.0
    %708 = vmatpush1.msra.mxu0 0.0
    %709 = vmatprep.subr.mxu0 0.0
    %710 = vmatpush1.msra.mxu0 0.0
    %711 = vmatprep.subr.mxu0 0.0
    %712 = vmatpush1.msra.mxu0 0.0
    %713 = vmatprep.subr.mxu0 0.0
    %714 = vmatpush1.msra.mxu0 0.0
    %715 = vmatprep.subr.mxu0 0.0
    %716 = vmatpush1.msra.mxu0 0.0
    %717 = vmatprep.subr.mxu0 0.0
    %718 = vmatpush1.msra.mxu0 0.0
    %719 = vmatprep.subr.mxu0 0.0
    %720 = vmatpush1.msra.mxu0 0.0
    %721 = vmatprep.subr.mxu0 0.0
    %722 = vmatpush1.msra.mxu0 0.0
    %723 = vmatprep.subr.mxu0 0.0
    %724 = vmatpush1.msra.mxu0 0.0
    %725 = vmatprep.subr.mxu0 0.0
    %726 = vmatpush1.msra.mxu0 0.0
    %727 = vmatprep.subr.mxu0 0.0
    %728 = vmatpush1.msra.mxu0 0.0
    %729 = vmatprep.subr.mxu0 0.0
    %730 = vmatpush1.msra.mxu0 0.0
    %731 = vmatprep.subr.mxu0 0.0
    %732 = vmatpush1.msra.mxu0 0.0
    %733 = vmatprep.subr.mxu0 0.0
    %734 = vmatpush1.msra.mxu0 0.0
    %735 = vmatprep.subr.mxu0 0.0
    %736 = vmatpush1.msra.mxu0 0.0
    %737 = vmatprep.subr.mxu0 0.0
    %738 = vmatpush1.msra.mxu0 0.0
    %739 = vmatprep.subr.mxu0 0.0
    %740 = vmatpush1.msra.mxu0 0.0
    %741 = vmatprep.subr.mxu0 0.0
    %742 = vmatpush1.msra.mxu0 0.0
    %743 = vmatprep.subr.mxu0 0.0
    %744 = vmatpush1.msra.mxu0 0.0
    %745 = vmatprep.subr.mxu0 0.0
    %746 = vmatpush1.msra.mxu0 0.0
    %747 = vmatprep.subr.mxu0 0.0
    %748 = vmatpush1.msra.mxu0 0.0
    %749 = vmatprep.subr.mxu0 0.0
    %750 = vmatpush1.msra.mxu0 0.0
    %751 = vmatprep.subr.mxu0 0.0
    %752 = vmatpush1.msra.mxu0 0.0
    %753 = vmatprep.subr.mxu0 0.0
    %754 = vmatpush1.msra.mxu0 0.0
    %755 = vmatprep.subr.mxu0 0.0
    %756 = vmatpush1.msra.mxu0 0.0
    %757 = vmatprep.subr.mxu0 0.0
    %758 = vmatpush1.msra.mxu0 0.0
    %759 = vmatprep.mubr.f32.mxu0 0.0
    %v760 = vand.u32 %v685, 4294901760
    %v761 = vsub.f32 %v685, %v760
    %v762 = vand.u32 %v761, 4294901760
    %v763 = vsub.f32 %v761, %v762
    %v764 = vand.u32 %v763, 4294901760
    %765 = vmatmul.mubr.f32.gmra.mrb[0].mxu0 %v764
    %v766 = vpop.f32.mrb[0].mxu0
    %v767 = vadd.f32 %v682, %v766
    %v768 = vpop.f32.mrb[0].mxu0
    %v769 = vadd.f32 %v683, %v768
    %770 = vdwg.mxu0
    %v771 = vand.u32 %v116, 4294901760
    %v772 = vsub.f32 %v116, %v771
    %v773 = vand.u32 %v772, 4294901760
    %v774 = vsub.f32 %v772, %v773
    %v775 = vand.u32 %v774, 4294901760
    %776 = vmatprep.subr.mxu0 %v775
    %v777 = vand.u32 %v115, 4294901760
    %v778 = vsub.f32 %v115, %v777
    %v779 = vand.u32 %v778, 4294901760
    %v780 = vsub.f32 %v778, %v779
    %v781 = vand.u32 %v780, 4294901760
    %782 = vmatpush1.msra.mxu0 %v781
    %v783 = vand.u32 %v118, 4294901760
    %v784 = vsub.f32 %v118, %v783
    %v785 = vand.u32 %v784, 4294901760
    %v786 = vsub.f32 %v784, %v785
    %v787 = vand.u32 %v786, 4294901760
    %788 = vmatprep.subr.mxu0 %v787
    %v789 = vand.u32 %v117, 4294901760
    %v790 = vsub.f32 %v117, %v789
    %v791 = vand.u32 %v790, 4294901760
    %v792 = vsub.f32 %v790, %v791
    %v793 = vand.u32 %v792, 4294901760
    %794 = vmatpush1.msra.mxu0 %v793
    %v795 = vand.u32 %v120, 4294901760
    %v796 = vsub.f32 %v120, %v795
    %v797 = vand.u32 %v796, 4294901760
    %v798 = vsub.f32 %v796, %v797
    %v799 = vand.u32 %v798, 4294901760
    %800 = vmatprep.subr.mxu0 %v799
    %v801 = vand.u32 %v119, 4294901760
    %v802 = vsub.f32 %v119, %v801
    %v803 = vand.u32 %v802, 4294901760
    %v804 = vsub.f32 %v802, %v803
    %v805 = vand.u32 %v804, 4294901760
    %806 = vmatpush1.msra.mxu0 %v805
    %v807 = vand.u32 %v122, 4294901760
    %v808 = vsub.f32 %v122, %v807
    %v809 = vand.u32 %v808, 4294901760
    %v810 = vsub.f32 %v808, %v809
    %v811 = vand.u32 %v810, 4294901760
    %812 = vmatprep.subr.mxu0 %v811
    %v813 = vand.u32 %v121, 4294901760
    %v814 = vsub.f32 %v121, %v813
    %v815 = vand.u32 %v814, 4294901760
    %v816 = vsub.f32 %v814, %v815
    %v817 = vand.u32 %v816, 4294901760
    %818 = vmatpush1.msra.mxu0 %v817
    %819 = vmatprep.subr.mxu0 0.0
    %820 = vmatpush1.msra.mxu0 0.0
    %821 = vmatprep.subr.mxu0 0.0
    %822 = vmatpush1.msra.mxu0 0.0
    %823 = vmatprep.subr.mxu0 0.0
    %824 = vmatpush1.msra.mxu0 0.0
    %825 = vmatprep.subr.mxu0 0.0
    %826 = vmatpush1.msra.mxu0 0.0
    %827 = vmatprep.subr.mxu0 0.0
    %828 = vmatpush1.msra.mxu0 0.0
    %829 = vmatprep.subr.mxu0 0.0
    %830 = vmatpush1.msra.mxu0 0.0
    %831 = vmatprep.subr.mxu0 0.0
    %832 = vmatpush1.msra.mxu0 0.0
    %833 = vmatprep.subr.mxu0 0.0
    %834 = vmatpush1.msra.mxu0 0.0
    %835 = vmatprep.subr.mxu0 0.0
    %836 = vmatpush1.msra.mxu0 0.0
    %837 = vmatprep.subr.mxu0 0.0
    %838 = vmatpush1.msra.mxu0 0.0
    %839 = vmatprep.subr.mxu0 0.0
    %840 = vmatpush1.msra.mxu0 0.0
    %841 = vmatprep.subr.mxu0 0.0
    %842 = vmatpush1.msra.mxu0 0.0
    %843 = vmatprep.subr.mxu0 0.0
    %844 = vmatpush1.msra.mxu0 0.0
    %845 = vmatprep.subr.mxu0 0.0
    %846 = vmatpush1.msra.mxu0 0.0
    %847 = vmatprep.subr.mxu0 0.0
    %848 = vmatpush1.msra.mxu0 0.0
    %849 = vmatprep.subr.mxu0 0.0
    %850 = vmatpush1.msra.mxu0 0.0
    %851 = vmatprep.subr.mxu0 0.0
    %852 = vmatpush1.msra.mxu0 0.0
    %853 = vmatprep.subr.mxu0 0.0
    %854 = vmatpush1.msra.mxu0 0.0
    %855 = vmatprep.subr.mxu0 0.0
    %856 = vmatpush1.msra.mxu0 0.0
    %857 = vmatprep.subr.mxu0 0.0
    %858 = vmatpush1.msra.mxu0 0.0
    %859 = vmatprep.subr.mxu0 0.0
    %860 = vmatpush1.msra.mxu0 0.0
    %861 = vmatprep.subr.mxu0 0.0
    %862 = vmatpush1.msra.mxu0 0.0
    %863 = vmatprep.subr.mxu0 0.0
    %864 = vmatpush1.msra.mxu0 0.0
    %865 = vmatprep.subr.mxu0 0.0
    %866 = vmatpush1.msra.mxu0 0.0
    %867 = vmatprep.subr.mxu0 0.0
    %868 = vmatpush1.msra.mxu0 0.0
    %869 = vmatprep.subr.mxu0 0.0
    %870 = vmatpush1.msra.mxu0 0.0
    %871 = vmatprep.subr.mxu0 0.0
    %872 = vmatpush1.msra.mxu0 0.0
    %873 = vmatprep.subr.mxu0 0.0
    %874 = vmatpush1.msra.mxu0 0.0
    %875 = vmatprep.mubr.f32.mxu0 0.0
    %v876 = vand.u32 %v685, 4294901760
    %877 = vmatmul.mubr.f32.gmra.mrb[0].mxu0 %v876
    %v878 = vpop.f32.mrb[0].mxu0
    %v879 = vadd.f32 %v767, %v878
    %v880 = vpop.f32.mrb[0].mxu0
    %v881 = vadd.f32 %v769, %v880
    %882 = vdwg.mxu0
    %v883 = vand.u32 %v116, 4294901760
    %v884 = vsub.f32 %v116, %v883
    %885 = vmatprep.subr.mxu0 %v884
    %v886 = vand.u32 %v115, 4294901760
    %v887 = vsub.f32 %v115, %v886
    %888 = vmatpush1.msra.mxu0 %v887
    %v889 = vand.u32 %v118, 4294901760
    %v890 = vsub.f32 %v118, %v889
    %891 = vmatprep.subr.mxu0 %v890
    %v892 = vand.u32 %v117, 4294901760
    %v893 = vsub.f32 %v117, %v892
    %894 = vmatpush1.msra.mxu0 %v893
    %v895 = vand.u32 %v120, 4294901760
    %v896 = vsub.f32 %v120, %v895
    %897 = vmatprep.subr.mxu0 %v896
    %v898 = vand.u32 %v119, 4294901760
    %v899 = vsub.f32 %v119, %v898
    %900 = vmatpush1.msra.mxu0 %v899
    %v901 = vand.u32 %v122, 4294901760
    %v902 = vsub.f32 %v122, %v901
    %903 = vmatprep.subr.mxu0 %v902
    %v904 = vand.u32 %v121, 4294901760
    %v905 = vsub.f32 %v121, %v904
    %906 = vmatpush1.msra.mxu0 %v905
    %907 = vmatprep.subr.mxu0 0.0
    %908 = vmatpush1.msra.mxu0 0.0
    %909 = vmatprep.subr.mxu0 0.0
    %910 = vmatpush1.msra.mxu0 0.0
    %911 = vmatprep.subr.mxu0 0.0
    %912 = vmatpush1.msra.mxu0 0.0
    %913 = vmatprep.subr.mxu0 0.0
    %914 = vmatpush1.msra.mxu0 0.0
    %915 = vmatprep.subr.mxu0 0.0
    %916 = vmatpush1.msra.mxu0 0.0
    %917 = vmatprep.subr.mxu0 0.0
    %918 = vmatpush1.msra.mxu0 0.0
    %919 = vmatprep.subr.mxu0 0.0
    %920 = vmatpush1.msra.mxu0 0.0
    %921 = vmatprep.subr.mxu0 0.0
    %922 = vmatpush1.msra.mxu0 0.0
    %923 = vmatprep.subr.mxu0 0.0
    %924 = vmatpush1.msra.mxu0 0.0
    %925 = vmatprep.subr.mxu0 0.0
    %926 = vmatpush1.msra.mxu0 0.0
    %927 = vmatprep.subr.mxu0 0.0
    %928 = vmatpush1.msra.mxu0 0.0
    %929 = vmatprep.subr.mxu0 0.0
    %930 = vmatpush1.msra.mxu0 0.0
    %931 = vmatprep.subr.mxu0 0.0
    %932 = vmatpush1.msra.mxu0 0.0
    %933 = vmatprep.subr.mxu0 0.0
    %934 = vmatpush1.msra.mxu0 0.0
    %935 = vmatprep.subr.mxu0 0.0
    %936 = vmatpush1.msra.mxu0 0.0
    %937 = vmatprep.subr.mxu0 0.0
    %938 = vmatpush1.msra.mxu0 0.0
    %939 = vmatprep.subr.mxu0 0.0
    %940 = vmatpush1.msra.mxu0 0.0
    %941 = vmatprep.subr.mxu0 0.0
    %942 = vmatpush1.msra.mxu0 0.0
    %943 = vmatprep.subr.mxu0 0.0
    %944 = vmatpush1.msra.mxu0 0.0
    %945 = vmatprep.subr.mxu0 0.0
    %946 = vmatpush1.msra.mxu0 0.0
    %947 = vmatprep.subr.mxu0 0.0
    %948 = vmatpush1.msra.mxu0 0.0
    %949 = vmatprep.subr.mxu0 0.0
    %950 = vmatpush1.msra.mxu0 0.0
    %951 = vmatprep.subr.mxu0 0.0
    %952 = vmatpush1.msra.mxu0 0.0
    %953 = vmatprep.subr.mxu0 0.0
    %954 = vmatpush1.msra.mxu0 0.0
    %955 = vmatprep.subr.mxu0 0.0
    %956 = vmatpush1.msra.mxu0 0.0
    %957 = vmatprep.subr.mxu0 0.0
    %958 = vmatpush1.msra.mxu0 0.0
    %959 = vmatprep.subr.mxu0 0.0
    %960 = vmatpush1.msra.mxu0 0.0
    %961 = vmatprep.subr.mxu0 0.0
    %962 = vmatpush1.msra.mxu0 0.0
    %963 = vmatprep.mubr.f32.mxu0 0.0
    %v964 = vand.u32 %v685, 4294901760
    %v965 = vsub.f32 %v685, %v964
    %966 = vmatmul.mubr.f32.gmra.mrb[0].mxu0 %v965
    %v967 = vpop.f32.mrb[0].mxu0
    %v968 = vadd.f32 %v879, %v967
    %v969 = vpop.f32.mrb[0].mxu0
    %v970 = vadd.f32 %v881, %v969
    %971 = vdwg.mxu0
    %v972 = vand.u32 %v116, 4294901760
    %973 = vmatprep.subr.mxu0 %v972
    %v974 = vand.u32 %v115, 4294901760
    %975 = vmatpush1.msra.mxu0 %v974
    %v976 = vand.u32 %v118, 4294901760
    %977 = vmatprep.subr.mxu0 %v976
    %v978 = vand.u32 %v117, 4294901760
    %979 = vmatpush1.msra.mxu0 %v978
    %v980 = vand.u32 %v120, 4294901760
    %981 = vmatprep.subr.mxu0 %v980
    %v982 = vand.u32 %v119, 4294901760
    %983 = vmatpush1.msra.mxu0 %v982
    %v984 = vand.u32 %v122, 4294901760
    %985 = vmatprep.subr.mxu0 %v984
    %v986 = vand.u32 %v121, 4294901760
    %987 = vmatpush1.msra.mxu0 %v986
    %988 = vmatprep.subr.mxu0 0.0
    %989 = vmatpush1.msra.mxu0 0.0
    %990 = vmatprep.subr.mxu0 0.0
    %991 = vmatpush1.msra.mxu0 0.0
    %992 = vmatprep.subr.mxu0 0.0
    %993 = vmatpush1.msra.mxu0 0.0
    %994 = vmatprep.subr.mxu0 0.0
    %995 = vmatpush1.msra.mxu0 0.0
    %996 = vmatprep.subr.mxu0 0.0
    %997 = vmatpush1.msra.mxu0 0.0
    %998 = vmatprep.subr.mxu0 0.0
    %999 = vmatpush1.msra.mxu0 0.0
    %1000 = vmatprep.subr.mxu0 0.0
    %1001 = vmatpush1.msra.mxu0 0.0
    %1002 = vmatprep.subr.mxu0 0.0
    %1003 = vmatpush1.msra.mxu0 0.0
    %1004 = vmatprep.subr.mxu0 0.0
    %1005 = vmatpush1.msra.mxu0 0.0
    %1006 = vmatprep.subr.mxu0 0.0
    %1007 = vmatpush1.msra.mxu0 0.0
    %1008 = vmatprep.subr.mxu0 0.0
    %1009 = vmatpush1.msra.mxu0 0.0
    %1010 = vmatprep.subr.mxu0 0.0
    %1011 = vmatpush1.msra.mxu0 0.0
    %1012 = vmatprep.subr.mxu0 0.0
    %1013 = vmatpush1.msra.mxu0 0.0
    %1014 = vmatprep.subr.mxu0 0.0
    %1015 = vmatpush1.msra.mxu0 0.0
    %1016 = vmatprep.subr.mxu0 0.0
    %1017 = vmatpush1.msra.mxu0 0.0
    %1018 = vmatprep.subr.mxu0 0.0
    %1019 = vmatpush1.msra.mxu0 0.0
    %1020 = vmatprep.subr.mxu0 0.0
    %1021 = vmatpush1.msra.mxu0 0.0
    %1022 = vmatprep.subr.mxu0 0.0
    %1023 = vmatpush1.msra.mxu0 0.0
    %1024 = vmatprep.subr.mxu0 0.0
    %1025 = vmatpush1.msra.mxu0 0.0
    %1026 = vmatprep.subr.mxu0 0.0
    %1027 = vmatpush1.msra.mxu0 0.0
    %1028 = vmatprep.subr.mxu0 0.0
    %1029 = vmatpush1.msra.mxu0 0.0
    %1030 = vmatprep.subr.mxu0 0.0
    %1031 = vmatpush1.msra.mxu0 0.0
    %1032 = vmatprep.subr.mxu0 0.0
    %1033 = vmatpush1.msra.mxu0 0.0
    %1034 = vmatprep.subr.mxu0 0.0
    %1035 = vmatpush1.msra.mxu0 0.0
    %1036 = vmatprep.subr.mxu0 0.0
    %1037 = vmatpush1.msra.mxu0 0.0
    %1038 = vmatprep.subr.mxu0 0.0
    %1039 = vmatpush1.msra.mxu0 0.0
    %1040 = vmatprep.subr.mxu0 0.0
    %1041 = vmatpush1.msra.mxu0 0.0
    %1042 = vmatprep.subr.mxu0 0.0
    %1043 = vmatpush1.msra.mxu0 0.0
    %1044 = vmatprep.mubr.f32.mxu0 0.0
    %v1045 = vand.u32 %v685, 4294901760
    %v1046 = vsub.f32 %v685, %v1045
    %v1047 = vand.u32 %v1046, 4294901760
    %1048 = vmatmul.mubr.f32.gmra.mrb[0].mxu0 %v1047
    %v1049 = vpop.f32.mrb[0].mxu0
    %v1050 = vadd.f32 %v968, %v1049
    %v1051 = vpop.f32.mrb[0].mxu0
    %v1052 = vadd.f32 %v970, %v1051
    %1053 = vdwg.mxu0
    %v1054 = vand.u32 %v116, 4294901760
    %v1055 = vsub.f32 %v116, %v1054
    %v1056 = vand.u32 %v1055, 4294901760
    %1057 = vmatprep.subr.mxu0 %v1056
    %v1058 = vand.u32 %v115, 4294901760
    %v1059 = vsub.f32 %v115, %v1058
    %v1060 = vand.u32 %v1059, 4294901760
    %1061 = vmatpush1.msra.mxu0 %v1060
    %v1062 = vand.u32 %v118, 4294901760
    %v1063 = vsub.f32 %v118, %v1062
    %v1064 = vand.u32 %v1063, 4294901760
    %1065 = vmatprep.subr.mxu0 %v1064
    %v1066 = vand.u32 %v117, 4294901760
    %v1067 = vsub.f32 %v117, %v1066
    %v1068 = vand.u32 %v1067, 4294901760
    %1069 = vmatpush1.msra.mxu0 %v1068
    %v1070 = vand.u32 %v120, 4294901760
    %v1071 = vsub.f32 %v120, %v1070
    %v1072 = vand.u32 %v1071, 4294901760
    %1073 = vmatprep.subr.mxu0 %v1072
    %v1074 = vand.u32 %v119, 4294901760
    %v1075 = vsub.f32 %v119, %v1074
    %v1076 = vand.u32 %v1075, 4294901760
    %1077 = vmatpush1.msra.mxu0 %v1076
    %v1078 = vand.u32 %v122, 4294901760
    %v1079 = vsub.f32 %v122, %v1078
    %v1080 = vand.u32 %v1079, 4294901760
    %1081 = vmatprep.subr.mxu0 %v1080
    %v1082 = vand.u32 %v121, 4294901760
    %v1083 = vsub.f32 %v121, %v1082
    %v1084 = vand.u32 %v1083, 4294901760
    %1085 = vmatpush1.msra.mxu0 %v1084
    %1086 = vmatprep.subr.mxu0 0.0
    %1087 = vmatpush1.msra.mxu0 0.0
    %1088 = vmatprep.subr.mxu0 0.0
    %1089 = vmatpush1.msra.mxu0 0.0
    %1090 = vmatprep.subr.mxu0 0.0
    %1091 = vmatpush1.msra.mxu0 0.0
    %1092 = vmatprep.subr.mxu0 0.0
    %1093 = vmatpush1.msra.mxu0 0.0
    %1094 = vmatprep.subr.mxu0 0.0
    %1095 = vmatpush1.msra.mxu0 0.0
    %1096 = vmatprep.subr.mxu0 0.0
    %1097 = vmatpush1.msra.mxu0 0.0
    %1098 = vmatprep.subr.mxu0 0.0
    %1099 = vmatpush1.msra.mxu0 0.0
    %1100 = vmatprep.subr.mxu0 0.0
    %1101 = vmatpush1.msra.mxu0 0.0
    %1102 = vmatprep.subr.mxu0 0.0
    %1103 = vmatpush1.msra.mxu0 0.0
    %1104 = vmatprep.subr.mxu0 0.0
    %1105 = vmatpush1.msra.mxu0 0.0
    %1106 = vmatprep.subr.mxu0 0.0
    %1107 = vmatpush1.msra.mxu0 0.0
    %1108 = vmatprep.subr.mxu0 0.0
    %1109 = vmatpush1.msra.mxu0 0.0
    %1110 = vmatprep.subr.mxu0 0.0
    %1111 = vmatpush1.msra.mxu0 0.0
    %1112 = vmatprep.subr.mxu0 0.0
    %1113 = vmatpush1.msra.mxu0 0.0
    %1114 = vmatprep.subr.mxu0 0.0
    %1115 = vmatpush1.msra.mxu0 0.0
    %1116 = vmatprep.subr.mxu0 0.0
    %1117 = vmatpush1.msra.mxu0 0.0
    %1118 = vmatprep.subr.mxu0 0.0
    %1119 = vmatpush1.msra.mxu0 0.0
    %1120 = vmatprep.subr.mxu0 0.0
    %1121 = vmatpush1.msra.mxu0 0.0
    %1122 = vmatprep.subr.mxu0 0.0
    %1123 = vmatpush1.msra.mxu0 0.0
    %1124 = vmatprep.subr.mxu0 0.0
    %1125 = vmatpush1.msra.mxu0 0.0
    %1126 = vmatprep.subr.mxu0 0.0
    %1127 = vmatpush1.msra.mxu0 0.0
    %1128 = vmatprep.subr.mxu0 0.0
    %1129 = vmatpush1.msra.mxu0 0.0
    %1130 = vmatprep.subr.mxu0 0.0
    %1131 = vmatpush1.msra.mxu0 0.0
    %1132 = vmatprep.subr.mxu0 0.0
    %1133 = vmatpush1.msra.mxu0 0.0
    %1134 = vmatprep.subr.mxu0 0.0
    %1135 = vmatpush1.msra.mxu0 0.0
    %1136 = vmatprep.subr.mxu0 0.0
    %1137 = vmatpush1.msra.mxu0 0.0
    %1138 = vmatprep.subr.mxu0 0.0
    %1139 = vmatpush1.msra.mxu0 0.0
    %1140 = vmatprep.subr.mxu0 0.0
    %1141 = vmatpush1.msra.mxu0 0.0
    %1142 = vmatprep.mubr.f32.mxu0 0.0
    %v1143 = vand.u32 %v685, 4294901760
    %1144 = vmatmul.mubr.f32.gmra.mrb[0].mxu0 %v1143
    %v1145 = vpop.f32.mrb[0].mxu0
    %v1146 = vadd.f32 %v1050, %v1145
    %v1147 = vpop.f32.mrb[0].mxu0
    %v1148 = vadd.f32 %v1052, %v1147
    %1149 = vdwg.mxu0
    %v1150 = vand.u32 %v116, 4294901760
    %1151 = vmatprep.subr.mxu0 %v1150
    %v1152 = vand.u32 %v115, 4294901760
    %1153 = vmatpush1.msra.mxu0 %v1152
    %v1154 = vand.u32 %v118, 4294901760
    %1155 = vmatprep.subr.mxu0 %v1154
    %v1156 = vand.u32 %v117, 4294901760
    %1157 = vmatpush1.msra.mxu0 %v1156
    %v1158 = vand.u32 %v120, 4294901760
    %1159 = vmatprep.subr.mxu0 %v1158
    %v1160 = vand.u32 %v119, 4294901760
    %1161 = vmatpush1.msra.mxu0 %v1160
    %v1162 = vand.u32 %v122, 4294901760
    %1163 = vmatprep.subr.mxu0 %v1162
    %v1164 = vand.u32 %v121, 4294901760
    %1165 = vmatpush1.msra.mxu0 %v1164
    %1166 = vmatprep.subr.mxu0 0.0
    %1167 = vmatpush1.msra.mxu0 0.0
    %1168 = vmatprep.subr.mxu0 0.0
    %1169 = vmatpush1.msra.mxu0 0.0
    %1170 = vmatprep.subr.mxu0 0.0
    %1171 = vmatpush1.msra.mxu0 0.0
    %1172 = vmatprep.subr.mxu0 0.0
    %1173 = vmatpush1.msra.mxu0 0.0
    %1174 = vmatprep.subr.mxu0 0.0
    %1175 = vmatpush1.msra.mxu0 0.0
    %1176 = vmatprep.subr.mxu0 0.0
    %1177 = vmatpush1.msra.mxu0 0.0
    %1178 = vmatprep.subr.mxu0 0.0
    %1179 = vmatpush1.msra.mxu0 0.0
    %1180 = vmatprep.subr.mxu0 0.0
    %1181 = vmatpush1.msra.mxu0 0.0
    %1182 = vmatprep.subr.mxu0 0.0
    %1183 = vmatpush1.msra.mxu0 0.0
    %1184 = vmatprep.subr.mxu0 0.0
    %1185 = vmatpush1.msra.mxu0 0.0
    %1186 = vmatprep.subr.mxu0 0.0
    %1187 = vmatpush1.msra.mxu0 0.0
    %1188 = vmatprep.subr.mxu0 0.0
    %1189 = vmatpush1.msra.mxu0 0.0
    %1190 = vmatprep.subr.mxu0 0.0
    %1191 = vmatpush1.msra.mxu0 0.0
    %1192 = vmatprep.subr.mxu0 0.0
    %1193 = vmatpush1.msra.mxu0 0.0
    %1194 = vmatprep.subr.mxu0 0.0
    %1195 = vmatpush1.msra.mxu0 0.0
    %1196 = vmatprep.subr.mxu0 0.0
    %1197 = vmatpush1.msra.mxu0 0.0
    %1198 = vmatprep.subr.mxu0 0.0
    %1199 = vmatpush1.msra.mxu0 0.0
    %1200 = vmatprep.subr.mxu0 0.0
    %1201 = vmatpush1.msra.mxu0 0.0
    %1202 = vmatprep.subr.mxu0 0.0
    %1203 = vmatpush1.msra.mxu0 0.0
    %1204 = vmatprep.subr.mxu0 0.0
    %1205 = vmatpush1.msra.mxu0 0.0
    %1206 = vmatprep.subr.mxu0 0.0
    %1207 = vmatpush1.msra.mxu0 0.0
    %1208 = vmatprep.subr.mxu0 0.0
    %1209 = vmatpush1.msra.mxu0 0.0
    %1210 = vmatprep.subr.mxu0 0.0
    %1211 = vmatpush1.msra.mxu0 0.0
    %1212 = vmatprep.subr.mxu0 0.0
    %1213 = vmatpush1.msra.mxu0 0.0
    %1214 = vmatprep.subr.mxu0 0.0
    %1215 = vmatpush1.msra.mxu0 0.0
    %1216 = vmatprep.subr.mxu0 0.0
    %1217 = vmatpush1.msra.mxu0 0.0
    %1218 = vmatprep.subr.mxu0 0.0
    %1219 = vmatpush1.msra.mxu0 0.0
    %1220 = vmatprep.subr.mxu0 0.0
    %1221 = vmatpush1.msra.mxu0 0.0
    %1222 = vmatprep.mubr.f32.mxu0 0.0
    %v1223 = vand.u32 %v685, 4294901760
    %1224 = vmatmul.mubr.f32.gmra.mrb[0].mxu0 %v1223
    %v1225 = vpop.f32.mrb[0].mxu0
    %v1226 = vadd.f32 %v1146, %v1225
    %v1227 = vpop.f32.mrb[0].mxu0
    %v1228 = vadd.f32 %v1148, %v1227
    %1229 = vdwg.mxu0
    %v1232 = vcombine.low %v1226, %v1228
    %v1234 = vunpack.c.l.s4 1983009808
    %v1235 = vunpack.c.0.s8 %v1234
    %v1236 = vlaneseq
    %v1237 = vshrl.u32 %v1236, 7
    %v1238 = vsub.s32 %v1235, %v1237
    %v1239 = vrot.slane %v1232, %v1238
    %1241 = vst [vmem:[#allocation7] sm:$0xf] %v1239
    // Predicated region
    $region26: #{tpu_custom_call.1} parent=1 // pred_check
      _
    $region27: #{tpu_custom_call.1} parent=1 // pred_check_branch
      %1243 = sbr.rel (0) target = $region29
    $region28: #{tpu_custom_call.1} parent=1 // pred_region
      %s1245 = ssub.s32 64, 64
      %1246 = vsyncadd [#allocation4], %s1245
      %s1248 = sshll.u32 [#allocation7], 4
      %s1249 = int_to_ptr.vmem [resolvable:$true] %s1248
      %1251 = dma.vmem_to_hbm [thread:$0]  %s1249, 64, %s4, [#allocation4]
    $region29: #{tpu_custom_call.1} parent=1 // pred_fallthru
      _
    // Predicated region
    $region30: #{tpu_custom_call.1} parent=1 // pred_check
      _
    $region31: #{tpu_custom_call.1} parent=1 // pred_check_branch
      %1253 = sbr.rel (0) target = $region33
    $region32: #{tpu_custom_call.1} parent=1 // pred_region
      %1254 = dma.done [#allocation4], 64
    $region33: #{tpu_custom_call.1} parent=1 // pred_fallthru
      _
    %1255 = vsyncpa [#allocation3], 1
    %1256 = vsyncpa [#allocation4], 1
    %1257 = vsyncpa [#allocation5], 1

</llo_original>
